<compile_context>
chip_gen: v7x
topology: tpu7x:2x2x1
jax: 0.10.0
libtpu: 0.0.40
codegen_flags: <defaults>
</compile_context>

<pallas_src>
import jax
import jax.numpy as jnp
from jax.experimental import pallas as pl
from jax.experimental.pallas import tpu as pltpu


def _wscale_kernel(scale_ref, bias_ref, x_ref, o_ref):
    # scale_ref: SMEM (1, 1) f32 scalar
    # bias_ref : VMEM (R, 1) or (1, L) f32 bias tile (broadcasts against x)
    # x_ref    : VMEM (R, L) input tile
    # o_ref    : VMEM (R, L) output tile
    s = scale_ref[0, 0]
    y = x_ref[...].astype(jnp.float32) * s + bias_ref[...]
    o_ref[...] = y.astype(o_ref.dtype)


def _aligned_divisors(n, unit):
    """Divisors of n that are multiples of unit, descending; [] if n % unit."""
    if unit <= 0 or n % unit != 0:
        return []
    m = n // unit
    divs = set()
    d = 1
    while d * d <= m:
        if m % d == 0:
            divs.add(d * unit)
            divs.add((m // d) * unit)
        d += 1
    return sorted(divs, reverse=True)


def _pick_block(dim, unit, cap):
    """Largest unit-aligned divisor of dim that is <= cap.

    Falls back to the smallest aligned divisor, or the full extent when dim is
    not a multiple of unit (full-extent blocks are always legal).
    """
    divs = _aligned_divisors(dim, unit)
    for d in divs:
        if d <= cap:
            return d
    if divs:
        return divs[-1]
    return dim


def _chip_defaults():
    """(target_block_bytes, vmem_limit_bytes) per TPU generation."""
    try:
        kind = jax.devices()[0].device_kind.lower()
    except Exception:
        kind = ""
    if "7" in kind:
        # v7x: ~3.2 TB/s HBM -> bigger tiles to amortize per-step overhead;
        # 64 MiB physical VMEM per TC -> cap scoped VMEM with headroom.
        return 4 * 1024 * 1024, 48 * 1024 * 1024
    if "v6" in kind:
        # v6e: 128 MiB VMEM, plenty of room for 4 MiB tiles double-buffered.
        return 4 * 1024 * 1024, 64 * 1024 * 1024
    if "v5" in kind:
        # v5e: 16 MiB default scoped VMEM and slower HBM -> 2 MiB is enough.
        return 2 * 1024 * 1024, None
    # Unknown: conservative.
    return 2 * 1024 * 1024, None


def _choose_layout(N, C, H, W):
    """Pick a 2D flatten whose lane axis is 128-aligned when possible.

    Returns (rows, lanes, bias_mode) with bias_mode in {"col_nc", "col_nch",
    "row"} describing how the per-channel bias maps onto the 2D view.
    """
    if (H * W) % 128 == 0:
        return N * C, H * W, "col_nc"
    if W % 128 == 0:
        return N * C * H, W, "col_nch"
    if (C * H * W) % 128 == 0:
        return N, C * H * W, "row"
    # Last resort: ragged lane axis (masked stores) -- still correct.
    return N * C, H * W, "col_nc"


def wscale_forward(x_nchw, scale, bias, *, target_block_bytes=None,
                   vmem_limit_bytes=None):
    """Applies y = scale * x + bias[None, :, None, None] via a Pallas kernel.

    Args:
      x_nchw: (N, C, H, W) array.
      scale:  scalar (float or 0-d array).
      bias:   (C,) array.
    Returns:
      (N, C, H, W) array, same dtype as x_nchw.
    """
    N, C, H, W = x_nchw.shape
    auto_tb, auto_vl = _chip_defaults()
    if target_block_bytes is None:
        target_block_bytes = auto_tb
    if vmem_limit_bytes is None:
        vmem_limit_bytes = auto_vl

    rows, lanes, mode = _choose_layout(N, C, H, W)
    x2d = x_nchw.reshape(rows, lanes)

    bias_f32 = bias.astype(jnp.float32)
    if mode == "col_nc":
        # row r = n*C + c  ->  bias[c]
        bias2d = jnp.tile(bias_f32, N).reshape(rows, 1)
    elif mode == "col_nch":
        # row r = (n*C + c)*H + h  ->  bias[c]
        bias2d = jnp.tile(jnp.repeat(bias_f32, H), N).reshape(rows, 1)
    else:  # "row": lane index = c*H*W + h*W + w  ->  bias[c]
        bias2d = jnp.repeat(bias_f32, H * W).reshape(1, lanes)

    scale_arr = jnp.asarray(scale, dtype=jnp.float32).reshape(1, 1)

    itemsize = jnp.dtype(x_nchw.dtype).itemsize
    # Lane block: prefer the full lane extent (one contiguous DMA slab per
    # block) as long as 8 rows of it fit the byte budget.
    lane_cap = max(128, target_block_bytes // (8 * itemsize))
    L = _pick_block(lanes, 128, min(lanes, lane_cap))
    # Row block: a multiple of 8 sublanes sized so the tile ~ target bytes.
    row_cap = max(8, target_block_bytes // max(1, L * itemsize))
    R = _pick_block(rows, 8, row_cap)

    # Guarantee >= 2 grid blocks so both v7x TensorCores get work
    # (no-op on single-core v5e/v6e). Prefer splitting rows; lanes otherwise.
    if (rows // R) * (lanes // L) < 2:
        smaller_r = [d for d in _aligned_divisors(rows, 8) if d < R]
        if smaller_r:
            R = smaller_r[0]
        else:
            smaller_l = [d for d in _aligned_divisors(lanes, 128) if d < L]
            if smaller_l:
                L = smaller_l[0]

    # Lane axis (j) innermost: the bias block index is constant across the
    # inner loop, so Pallas skips re-fetching it.
    grid = (rows // R, lanes // L)

    if mode == "row":
        bias_spec = pl.BlockSpec((1, L), lambda i, j: (0, j))
    else:
        bias_spec = pl.BlockSpec((R, 1), lambda i, j: (i, 0))

    out2d = pl.pallas_call(
        _wscale_kernel,
        out_shape=jax.ShapeDtypeStruct((rows, lanes), x_nchw.dtype),
        grid_spec=pltpu.PrefetchScalarGridSpec(
            num_scalar_prefetch=0,
            grid=grid,
            in_specs=[
                # scalar scale in SMEM, same for every grid step
                pl.BlockSpec((1, 1), lambda i, j: (0, 0),
                             memory_space=pltpu.SMEM),
                # bias tile, reused across the inner (lane) loop
                bias_spec,
                # dense (R, L) input tile
                pl.BlockSpec((R, L), lambda i, j: (i, j)),
            ],
            out_specs=pl.BlockSpec((R, L), lambda i, j: (i, j)),
        ),
        # Same-shape/same-dtype elementwise: let the output reuse x's buffer.
        input_output_aliases={2: 0},
        compiler_params=pltpu.CompilerParams(
            dimension_semantics=("parallel", "parallel"),
            vmem_limit_bytes=vmem_limit_bytes),
    )(scale_arr, bias2d, x2d)

    return out2d.reshape(N, C, H, W)


if __name__ == "__main__":
    key = jax.random.PRNGKey(0)
    k_x, k_w, k_b = jax.random.split(key, 3)

    # Small shapes consistent with a conv-preceded WScaleLayer.
    N, C, H, W = 2, 4, 16, 16
    # "Incoming" conv layer parameters (synthetic, deterministic):
    # weight: (C_out=C, C_in=3, kH=3, kW=3), bias: (C,)
    weight = jax.random.normal(k_w, (C, 3, 3, 3), dtype=jnp.float32)
    bias = jax.random.normal(k_b, (C,), dtype=jnp.float32)

    # __init__ semantics: scale = sqrt(mean(weight ** 2)); the weights are
    # rescaled in-place at init but the forward pass only uses scale and bias.
    scale = jnp.sqrt(jnp.mean(weight ** 2))

    x = jax.random.normal(k_x, (N, C, H, W), dtype=jnp.float32)

    # Reference computed before the (input-aliased) kernel call.
    y_ref = scale * x + bias[None, :, None, None]

    y = wscale_forward(x, scale, bias)
    y = jax.block_until_ready(y)

    assert jnp.allclose(y, y_ref, atol=1e-6, rtol=1e-6), "mismatch vs reference"

    print("KERNEL_OK")
</pallas_src>

<mosaic_0001>
module attributes {stable_mosaic.version = 11 : i64} {
  func.func @_wscale_kernel(%arg0: i32, %arg1: i32, %arg2: memref<1x1xf32, #tpu.memory_space<smem>>, %arg3: memref<8x1xf32, #tpu.memory_space<vmem>>, %arg4: memref<8x128xf32, #tpu.memory_space<vmem>>, %arg5: memref<8x128xf32, #tpu.memory_space<vmem>>) attributes {dimension_semantics = [#tpu.dimension_semantics<parallel>, #tpu.dimension_semantics<parallel>], iteration_bounds = array<i64: 1, 2>, scalar_prefetch = 0 : i64, scratch_operands = 0 : i64, tpu.core_type = #tpu.core_type<tc>, window_params = [{transform_indices = @transform_0, window_bounds = array<i64: 1, 1>}, {transform_indices = @transform_1, window_bounds = array<i64: 8, 1>}, {transform_indices = @transform_2, window_bounds = array<i64: 8, 128>}, {transform_indices = @transform_3, window_bounds = array<i64: 8, 128>}]} {
    %c0 = arith.constant 0 : index
    %c0_0 = arith.constant 0 : index
    %0 = memref.load %arg2[%c0, %c0_0] : memref<1x1xf32, #tpu.memory_space<smem>>
    %c0_1 = arith.constant 0 : index
    %c0_2 = arith.constant 0 : index
    %1 = vector.load %arg4[%c0_1, %c0_2] : memref<8x128xf32, #tpu.memory_space<vmem>>, vector<8x128xf32>
    %2 = vector.broadcast %0 : f32 to vector<8x128xf32>
    %3 = arith.mulf %1, %2 : vector<8x128xf32>
    %c0_3 = arith.constant 0 : index
    %c0_4 = arith.constant 0 : index
    %4 = vector.load %arg3[%c0_3, %c0_4] : memref<8x1xf32, #tpu.memory_space<vmem>>, vector<8x1xf32>
    %5 = vector.broadcast %4 : vector<8x1xf32> to vector<8x128xf32>
    %6 = arith.addf %3, %5 : vector<8x128xf32>
    %c0_5 = arith.constant 0 : index
    %c0_6 = arith.constant 0 : index
    %7 = vector.load %arg5[%c0_5, %c0_6] : memref<8x128xf32, #tpu.memory_space<vmem>>, vector<8x128xf32>
    tpu.vector_store %arg5[%c0_5, %c0_6], %6 {strides = array<i32>} : memref<8x128xf32, #tpu.memory_space<vmem>>, vector<8x128xf32>,
    return
  }
  func.func @transform_0(%arg0: i32, %arg1: i32) -> (i32, i32) {
    %c0_i32 = arith.constant 0 : i32
    %c0_i32_0 = arith.constant 0 : i32
    %c0_i32_1 = arith.constant 0 : i32
    return %c0_i32, %c0_i32_0 : i32, i32
  }
  func.func @transform_1(%arg0: i32, %arg1: i32) -> (i32, i32) {
    %c0_i32 = arith.constant 0 : i32
    %c0_i32_0 = arith.constant 0 : i32
    return %arg0, %c0_i32 : i32, i32
  }
  func.func @transform_2(%arg0: i32, %arg1: i32) -> (i32, i32) {
    %c0_i32 = arith.constant 0 : i32
    return %arg0, %arg1 : i32, i32
  }
  func.func @transform_3(%arg0: i32, %arg1: i32) -> (i32, i32) {
    %c0_i32 = arith.constant 0 : i32
    return %arg0, %arg1 : i32, i32
  }
}

</mosaic_0001>

<llo_original>
// kernel: tpu_custom_call.1
$region0: #{tpu_custom_call.1}
  #allocation0 [shape = 'u32[]', space=smem, size = 0x4, offset = 0x4, fixed_abs, tag = 'smem constant byte address 0x4 - core index']
  #allocation1 [shape = 'u32[144,128]{1,0:T(1,128)}', space=vmem, size = 0x12000, scoped, tag = 'internal scratch']
  #allocation2 [shape = 'f32[1,1]{1,0:T(1,128)S(6)}', space=smem, size = 0x200, scoped, tag = 'scoped memory for tpu_custom_call.1']
  %s0 = inlined_call_operand.<no memory space> [shape: f32[1,1], index: 0, kind: input, shape index: {}]
  %s1 = inlined_call_operand.vmem [shape: f32[8,1], index: 1, kind: input, shape index: {}]
  %s2 = inlined_call_operand.hbm [shape: f32[8,256], index: 2, kind: input, shape index: {}, may-alias: {2,3}]
  %s3 = inlined_call_operand.hbm [shape: f32[8,256], index: 3, kind: output, shape index: {}, may-alias: {2,3}]
  %s4 = sld [smem:[#allocation0]]
  $region49: #{tpu_custom_call.1} parent=0
    _
  %s6 = ssub.s32 1, %s4
  %s7 = scalar_select 0, %s6, %s4
  %8 = sst [smem:[#allocation2]] %s0
  $region1: #{tpu_custom_call.1} parent=0
    #allocation3 [shape = 'u8[8192]{0}', space=vmem, size = 0x2000, scoped, tag = 'input window, operand 2']
    #allocation4 [shape = 's32[2]{0}', space=sflag, size = 0x8, scoped, tag = 'scoped memory for tpu_custom_call.1']
    #allocation5 [shape = 's32[2]{0}', space=sflag, size = 0x8, scoped, tag = 'scoped memory for tpu_custom_call.1']
    #allocation6 [shape = 'u8[8192]{0}', space=vmem, size = 0x2000, scoped, tag = 'output window, operand 0']
    %9 = vsyncpa [#allocation4], 0
    %s10 = scalar_lea.sflag [#allocation4], 1
    %11 = vsyncpa %s10, 0
    %12 = vsyncpa [#allocation5], 0
    %s13 = scalar_lea.sflag [#allocation5], 1
    %14 = vsyncpa %s13, 0
    loop: start=0, step=1, limit=4
    $region2: #{tpu_custom_call.1} parent=1 // loop_pre_header
      _
    $region3: #{tpu_custom_call.1} parent=1 // loop_header
      %s16 = sphi 0, %s20
      %p17 = scmp.ge.s32.totalorder %s16, 4
      %s23 = sphi 0, %s35
      %s24 = sphi 0, %s31
      %s25 = sphi 0, %s23
      %s26 = sphi 0, %s24
      %s27 = sphi 0, %s25
      %s28 = sphi 0, %s26
      %s36 = sphi 0, %s36
      %s38 = sphi 0, %s36
      %s39 = sphi 0, %s38
      %s53 = sphi 0, %s39
      %s59 = sphi 0, %s61
      %s62 = sphi 0, %s59
      %s63 = sphi 0, %s62
      %s79 = sphi 0, %s63
      %s87 = sphi 0, %s89
      %s90 = sphi 0, %s87
      %s91 = sphi 0, %s90
      %s107 = sphi 0, %s91
      %s115 = sphi 0, %s117
      %s118 = sphi 0, %s115
      %s119 = sphi 0, %s118
      %s135 = sphi 0, %s119
    $region4: #{tpu_custom_call.1} parent=1 // loop_header_branch
      %19 = sbr.rel (%p17) target = $region8
    $region5: #{tpu_custom_call.1} parent=1 // loop_body
      %s21 = ssub.s32 %s16, 1
      %s22 = ssub.s32 %s16, 2
      %s29 = sadd.s32 1, %s24
      %p30 = scmp.ge.s32.totalorder %s29, 2
      %s31 = scalar_select %p30, 0, %s29
      %s32 = sadd.s32 1, %s23
      %s33 = scalar_select %p30, %s32, %s23
      %p34 = scmp.ge.s32.totalorder %s33, 1
      %s35 = scalar_select %p34, 0, %s33
      %s37 = sadd.s32 %s36, 1
      %p40 = scmp.eq.s32.totalorder %s16, 1
      %p41 = scmp.ne.s32.totalorder %s36, %s38
      %p42 = scmp.eq.s32.totalorder %s16, 0
      %p43 = por %p41, %p42
      %p44 = scmp.ne.s32.totalorder %s36, %s38
      %p45 = scmp.eq.s32.totalorder %s21, 1
      %p46 = por %p44, %p45
      %p47 = scmp.ne.s32.totalorder %s38, %s39
      %p48 = scmp.eq.s32.totalorder %s21, 0
      %p49 = por %p47, %p48
      %p50 = scmp.ne.s32.totalorder %s38, %s39
      %p51 = scmp.eq.s32.totalorder %s22, 1
      %p52 = por %p50, %p51
      %p54 = scmp.ne.s32.totalorder %s39, %s53
      %p55 = scmp.eq.s32.totalorder %s22, 0
      %p56 = por %p54, %p55
      %s57 = ssub.s32 %s23, %s35
      %p58 = scmp.eq.s32.totalorder %s57, 0
      %s60 = sadd.s32 %s59, 1
      %s61 = scalar_select %p58, %s59, %s60
      %p64 = pneg %p58
      %p65 = scmp.eq.s32.totalorder %s16, 1
      %p66 = por %p64, %p65
      %p67 = scmp.ne.s32.totalorder %s59, %s62
      %p68 = scmp.eq.s32.totalorder %s16, 0
      %p69 = por %p67, %p68
      %p70 = scmp.ne.s32.totalorder %s59, %s62
      %p71 = scmp.eq.s32.totalorder %s21, 1
      %p72 = por %p70, %p71
      %p73 = scmp.ne.s32.totalorder %s62, %s63
      %p74 = scmp.eq.s32.totalorder %s21, 0
      %p75 = por %p73, %p74
      %p76 = scmp.ne.s32.totalorder %s62, %s63
      %p77 = scmp.eq.s32.totalorder %s22, 1
      %p78 = por %p76, %p77
      %p80 = scmp.ne.s32.totalorder %s63, %s79
      %p81 = scmp.eq.s32.totalorder %s22, 0
      %p82 = por %p80, %p81
      %s83 = ssub.s32 %s23, %s35
      %s84 = ssub.s32 %s24, %s31
      %s85 = sor.u32 %s83, %s84
      %p86 = scmp.eq.s32.totalorder %s85, 0
      %s88 = sadd.s32 %s87, 1
      %s89 = scalar_select %p86, %s87, %s88
      %p92 = pneg %p86
      %p93 = scmp.eq.s32.totalorder %s16, 1
      %p94 = por %p92, %p93
      %p95 = scmp.ne.s32.totalorder %s87, %s90
      %p96 = scmp.eq.s32.totalorder %s16, 0
      %p97 = por %p95, %p96
      %p98 = scmp.ne.s32.totalorder %s87, %s90
      %p99 = scmp.eq.s32.totalorder %s21, 1
      %p100 = por %p98, %p99
      %p101 = scmp.ne.s32.totalorder %s90, %s91
      %p102 = scmp.eq.s32.totalorder %s21, 0
      %p103 = por %p101, %p102
      %p104 = scmp.ne.s32.totalorder %s90, %s91
      %p105 = scmp.eq.s32.totalorder %s22, 1
      %p106 = por %p104, %p105
      %p108 = scmp.ne.s32.totalorder %s91, %s107
      %p109 = scmp.eq.s32.totalorder %s22, 0
      %p110 = por %p108, %p109
      %s111 = ssub.s32 %s23, %s35
      %s112 = ssub.s32 %s24, %s31
      %s113 = sor.u32 %s111, %s112
      %p114 = scmp.eq.s32.totalorder %s113, 0
      %s116 = sadd.s32 %s115, 1
      %s117 = scalar_select %p114, %s115, %s116
      %p120 = pneg %p114
      %p121 = scmp.eq.s32.totalorder %s16, 1
      %p122 = por %p120, %p121
      %p123 = scmp.ne.s32.totalorder %s115, %s118
      %p124 = scmp.eq.s32.totalorder %s16, 0
      %p125 = por %p123, %p124
      %p126 = scmp.ne.s32.totalorder %s115, %s118
      %p127 = scmp.eq.s32.totalorder %s21, 1
      %p128 = por %p126, %p127
      %p129 = scmp.ne.s32.totalorder %s118, %s119
      %p130 = scmp.eq.s32.totalorder %s21, 0
      %p131 = por %p129, %p130
      %p132 = scmp.ne.s32.totalorder %s118, %s119
      %p133 = scmp.eq.s32.totalorder %s22, 1
      %p134 = por %p132, %p133
      %p136 = scmp.ne.s32.totalorder %s119, %s135
      %p137 = scmp.eq.s32.totalorder %s22, 0
      %p138 = por %p136, %p137
      %p139 = scmp.le.s32.totalorder 1, %s16
      %p140 = scmp.lt.s32.totalorder %s16, 3
      %p141 = pnand %p139, %p140
      %p142 = pneg %p141
      // Predicated region
      $region9: #{tpu_custom_call.1} parent=5 // pred_check
        _
      $region10: #{tpu_custom_call.1} parent=5 // pred_check_branch
        %144 = sbr.rel (%p141) target = $region12
      $region11: #{tpu_custom_call.1} parent=5 // pred_region
        %s145 = ssub.s32 %s16, 1
        // Predicated region
        $region13: #{tpu_custom_call.1} parent=11 // pred_check
          %p146 = pneg %p49
        $region14: #{tpu_custom_call.1} parent=11 // pred_check_branch
          %148 = sbr.rel (%p146) target = $region16
        $region15: #{tpu_custom_call.1} parent=11 // pred_region
          _
        $region16: #{tpu_custom_call.1} parent=11 // pred_fallthru
          _
        // Predicated region
        $region17: #{tpu_custom_call.1} parent=11 // pred_check
          %p149 = pneg %p75
        $region18: #{tpu_custom_call.1} parent=11 // pred_check_branch
          %151 = sbr.rel (%p149) target = $region20
        $region19: #{tpu_custom_call.1} parent=11 // pred_region
          %p152 = scmp.lt.s32.totalorder %s25, 0
          %s153 = scalar_select %p152, %s25, 0
          %s154 = smul.addr %s153, 8
          %s155 = scalar_lea.vmem %s1, %s154
        $region20: #{tpu_custom_call.1} parent=11 // pred_fallthru
          _
      $region12: #{tpu_custom_call.1} parent=5 // pred_fallthru
        _
      %p156 = scmp.lt.s32.totalorder %s16, 2
      // Predicated region
      $region21: #{tpu_custom_call.1} parent=5 // pred_check
        %p157 = pneg %p156
      $region22: #{tpu_custom_call.1} parent=5 // pred_check_branch
        %159 = sbr.rel (%p157) target = $region24
      $region23: #{tpu_custom_call.1} parent=5 // pred_region
        // Predicated region
        $region25: #{tpu_custom_call.1} parent=23 // pred_check
          %p160 = pneg %p97
        $region26: #{tpu_custom_call.1} parent=23 // pred_check_branch
          %162 = sbr.rel (%p160) target = $region28
        $region27: #{tpu_custom_call.1} parent=23 // pred_region
          %s163 = sand.u32 %s87, 1
          %s164 = scalar_lea.sflag [#allocation4], %s163
          %s165 = sand.u32 %s87, 1
          %s166 = smul.addr %s165, 8
          %s167 = scalar_lea.vmem [#allocation3], %s166
          %s169 = ssub.s32 128, 128
          %170 = vsyncadd %s164, %s169
          %s171 = smul.addr %s23, 2
          %s172 = sadd.s32 %s24, %s171
          %s173 = smul.addr %s172, 128
          %s174 = scalar_lea.hbm %s2, %s173
          %s176 = sshll.u32 %s167, 4
          %s177 = int_to_ptr.vmem [resolvable:$true] %s176
          %179 = dma.hbm_to_vmem [thread:$0]  %s174, 128, %s177, %s164
        $region28: #{tpu_custom_call.1} parent=23 // pred_fallthru
          _
      $region24: #{tpu_custom_call.1} parent=5 // pred_fallthru
        _
      %p180 = scmp.le.s32.totalorder 1, %s16
      %p181 = scmp.lt.s32.totalorder %s16, 3
      %p182 = pnand %p180, %p181
      %p183 = pneg %p182
      // Predicated region
      $region29: #{tpu_custom_call.1} parent=5 // pred_check
        _
      $region30: #{tpu_custom_call.1} parent=5 // pred_check_branch
        %185 = sbr.rel (%p182) target = $region32
      $region31: #{tpu_custom_call.1} parent=5 // pred_region
        %s186 = ssub.s32 %s16, 1
        %s187 = sand.u32 %s90, 1
        %s188 = scalar_lea.sflag [#allocation4], %s187
        %s189 = sand.u32 %s90, 1
        %s190 = smul.addr %s189, 8
        %s191 = scalar_lea.vmem [#allocation3], %s190
        // Predicated region
        $region33: #{tpu_custom_call.1} parent=31 // pred_check
          %p192 = pneg %p103
        $region34: #{tpu_custom_call.1} parent=31 // pred_check_branch
          %194 = sbr.rel (%p192) target = $region36
        $region35: #{tpu_custom_call.1} parent=31 // pred_region
          %195 = dma.done %s188, 128
        $region36: #{tpu_custom_call.1} parent=31 // pred_fallthru
          _
        %p196 = pneg %p49
        %p197 = pneg %p46
        %p198 = scmp.lt.s32.totalorder %s25, 0
        %s199 = scalar_select %p198, %s25, 0
        %s200 = smul.addr %s199, 8
        %s201 = scalar_lea.vmem %s1, %s200
        %p202 = pneg %p75
        %p203 = pneg %p72
        %s204 = sand.u32 %s90, 1
        %s205 = scalar_lea.sflag [#allocation4], %s204
        %s206 = sand.u32 %s90, 1
        %s207 = smul.addr %s206, 8
        %s208 = scalar_lea.vmem [#allocation3], %s207
        %p209 = pneg %p103
        %p210 = pneg %p100
        %p211 = pneg %p131
        %p212 = pneg %p128
        %s213 = sand.u32 %s118, 1
        %s214 = scalar_lea.sflag [#allocation5], %s213
        %s215 = sand.u32 %s118, 1
        %s216 = smul.addr %s215, 8
        %s217 = scalar_lea.vmem [#allocation6], %s216
        %p218 = scmp.lt.s32.totalorder %s25, 0
        %s219 = scalar_select %p218, %s25, 0
        %s220 = smul.addr %s219, 8
        %s221 = scalar_lea.vmem %s1, %s220
        %s222 = sld [smem:[#allocation2]]
        %v223 = vld [vmem:[%s191] sm:$0xff]
        %v224 = vstv %s222
        %v225 = vmul.f32 %v223, %v224
        %v226 = vld [vmem:[%s221] sm:$0xff]
        %228 = vset.pattern.permute.xlu0 0
        %229 = vperm.xlu0 %228, %v226
        %v230 = vpop.permute.xlu0 %229
        %v232 = vadd.f32 %v225, %v230
        %233 = vst [vmem:[%s217] sm:$0xff] %v232
        %s234 = sand.u32 %s118, 1
        %s235 = scalar_lea.sflag [#allocation5], %s234
        %s236 = sand.u32 %s118, 1
        %s237 = smul.addr %s236, 8
        %s238 = scalar_lea.vmem [#allocation6], %s237
        // Predicated region
        $region37: #{tpu_custom_call.1} parent=31 // pred_check
          %p239 = pneg %p128
        $region38: #{tpu_custom_call.1} parent=31 // pred_check_branch
          %241 = sbr.rel (%p239) target = $region40
        $region39: #{tpu_custom_call.1} parent=31 // pred_region
          %s243 = ssub.s32 128, 128
          %244 = vsyncadd %s235, %s243
          %s245 = smul.addr %s25, 2
          %s246 = sadd.s32 %s26, %s245
          %s247 = smul.addr %s246, 128
          %s248 = scalar_lea.hbm %s3, %s247
          %s250 = sshll.u32 %s238, 4
          %s251 = int_to_ptr.vmem [resolvable:$true] %s250
          %253 = dma.vmem_to_hbm [thread:$0]  %s251, 128, %s248, %s235
        $region40: #{tpu_custom_call.1} parent=31 // pred_fallthru
          _
      $region32: #{tpu_custom_call.1} parent=5 // pred_fallthru
        _
      %p254 = scmp.le.s32.totalorder 2, %s16
      // Predicated region
      $region41: #{tpu_custom_call.1} parent=5 // pred_check
        %p255 = pneg %p254
      $region42: #{tpu_custom_call.1} parent=5 // pred_check_branch
        %257 = sbr.rel (%p255) target = $region44
      $region43: #{tpu_custom_call.1} parent=5 // pred_region
        %s258 = ssub.s32 %s16, 2
        // Predicated region
        $region45: #{tpu_custom_call.1} parent=43 // pred_check
          %p259 = pneg %p134
        $region46: #{tpu_custom_call.1} parent=43 // pred_check_branch
          %261 = sbr.rel (%p259) target = $region48
        $region47: #{tpu_custom_call.1} parent=43 // pred_region
          %s262 = sand.u32 %s119, 1
          %s263 = scalar_lea.sflag [#allocation5], %s262
          %s264 = sand.u32 %s119, 1
          %s265 = smul.addr %s264, 8
          %s266 = scalar_lea.vmem [#allocation6], %s265
          %267 = dma.done %s263, 128
        $region48: #{tpu_custom_call.1} parent=43 // pred_fallthru
          _
      $region44: #{tpu_custom_call.1} parent=5 // pred_fallthru
        _
    $region6: #{tpu_custom_call.1} parent=1 // loop_footer
      %s20 = sadd.s32 1, %s16
    $region7: #{tpu_custom_call.1} parent=1 // loop_footer_branch
      %15 = sbr.rel target = $region3
    $region8: #{tpu_custom_call.1} parent=1 // loop_exit
      _
    %268 = vsyncpa [#allocation4], 1
    %s269 = scalar_lea.sflag [#allocation4], 1
    %270 = vsyncpa %s269, 1
    %271 = vsyncpa [#allocation5], 1
    %s272 = scalar_lea.sflag [#allocation5], 1
    %273 = vsyncpa %s272, 1

</llo_original>
